<compile_context>
chip_gen: v6e
topology: v6e:2x2x1
jax: 0.10.0
libtpu: 0.0.40
codegen_flags: <defaults>
</compile_context>

<pallas_src>
import jax
import jax.numpy as jnp
from jax.experimental import pallas as pl
from jax.experimental.pallas import tpu as pltpu

_EPS = 1e-9


def _cdiv(a, b):
    return -(-a // b)


def _pow(x, g):
    # torch.pow with a static float exponent; specialize gamma == 2.0
    if float(g) == 2.0:
        return x * x
    return jnp.power(x, g)


def _make_kernel(alpha, gamma, iou_loss_type, num_valid, block_rows):
    iou_type = iou_loss_type.lower()
    alpha = float(alpha)

    def kernel(cls_ref, lbl_ref, pred_ref, tgt_ref, ctn_ref, cen_ref, out_ref,
               focal_acc, reg_acc, ctn_acc, pos_acc, norm_acc):
        split = pl.program_id(0)
        i = pl.program_id(1)
        nb = pl.num_programs(1)

        @pl.when(i == 0)
        def _init():
            focal_acc[...] = jnp.zeros_like(focal_acc)
            reg_acc[...] = jnp.zeros_like(reg_acc)
            ctn_acc[...] = jnp.zeros_like(ctn_acc)
            pos_acc[...] = jnp.zeros_like(pos_acc)
            norm_acc[...] = jnp.zeros_like(norm_acc)

        labels = lbl_ref[...][0]                 # (TB, 128) float class ids, 0 = bg
        cen_t = cen_ref[...][0]                  # (TB, 128) centerness target
        mask = (labels > 0.0).astype(jnp.float32)

        # validity of each lane: anchors beyond the real M are padding.
        row = jax.lax.broadcasted_iota(jnp.int32, (block_rows, 128), 0)
        lane = jax.lax.broadcasted_iota(jnp.int32, (block_rows, 128), 1)
        base_row = (split * nb + i) * block_rows
        gidx = (base_row + row) * 128 + lane
        valid = (gidx < num_valid).astype(jnp.float32)

        # ---- sigmoid focal loss (classification) ----
        logits = cls_ref[...]                    # (C, TB, 128)
        cls_idx = jax.lax.broadcasted_iota(jnp.int32, logits.shape, 0) + 1
        onehot = labels.astype(jnp.int32)[None, :, :] == cls_idx      # (C, TB, 128)
        p = jax.nn.sigmoid(logits)
        pc = 1.0 - p
        # reference:   onehot * alpha   * (1-p)^g * (-log(p   + eps))
        #          + (1-onehot)*(1-alpha)*  p^g   * (-log(1-p + eps))
        # folded into one log via selects (same per-branch fp values, eps kept).
        w = jnp.where(onehot, alpha, 1.0 - alpha)
        pow_arg = jnp.where(onehot, pc, p)
        log_arg = jnp.where(onehot, p, pc)
        focal = w * _pow(pow_arg, gamma) * (0.0 - jnp.log(log_arg + _EPS))
        focal_acc[...] += jnp.sum(focal, axis=0) * valid    # channel sum = VPU adds

        # ---- IoU regression loss ----
        pred = pred_ref[...]                     # (4, TB, 128)
        tgt = tgt_ref[...]
        plw, pth = pred[0] * mask, pred[1] * mask
        prw, pbh = pred[2] * mask, pred[3] * mask
        tlw, tth = tgt[0] * mask, tgt[1] * mask
        trw, tbh = tgt[2] * mask, tgt[3] * mask
        ilw, irw = jnp.minimum(plw, tlw), jnp.minimum(prw, trw)
        ith, ibh = jnp.minimum(pth, tth), jnp.minimum(pbh, tbh)
        area_p = (plw + prw) * (pth + pbh)
        area_t = (tlw + trw) * (tth + tbh)
        area_i = (ilw + irw) * (ith + ibh)
        ious = (area_i + 1.0) / (area_p + area_t - area_i + 1.0)
        ious = ious * mask
        if iou_type == 'linear_iou':
            loss = 1.0 - ious
        elif iou_type == 'giou':
            clw, crw = jnp.maximum(plw, tlw), jnp.maximum(prw, trw)
            cth, cbh = jnp.maximum(pth, tth), jnp.maximum(pbh, tbh)
            area_u = area_p + area_t - area_i
            area_c = (clw + crw) * (cth + cbh) + 1e-7
            giou = ious - (area_c - area_u) / area_c
            loss = 1.0 - giou
        elif iou_type == 'iou':
            # Guard only padded lanes against log(0); real rows keep exact semantics.
            loss = 0.0 - jnp.log(jnp.where(valid > 0.0, ious, 1.0))
        else:
            raise KeyError(iou_loss_type)
        reg_acc[...] += loss * cen_t * mask

        # ---- centerness BCE with logits ----
        pcn = jax.nn.sigmoid(ctn_ref[...][0])
        bce = (cen_t * (0.0 - jnp.log(pcn + _EPS))
               + (1.0 - cen_t) * (0.0 - jnp.log(1.0 - pcn + _EPS)))
        ctn_acc[...] += bce * mask

        pos_acc[...] += mask                    # num_positive partial
        norm_acc[...] += cen_t * mask           # normalize_sum partial

        # cross-lane reductions only once, at the last block of this split
        @pl.when(i == nb - 1)
        def _finalize():
            f = jnp.sum(focal_acc[...], keepdims=True)       # (1, 1)
            r = jnp.sum(reg_acc[...], keepdims=True)
            cn = jnp.sum(ctn_acc[...], keepdims=True)
            ps = jnp.sum(pos_acc[...], keepdims=True)
            nm = jnp.sum(norm_acc[...], keepdims=True)
            lane_i = jax.lax.broadcasted_iota(jnp.int32, (1, 128), 1)
            out_ref[...] = (jnp.where(lane_i == 0, f, 0.0)
                            + jnp.where(lane_i == 1, r, 0.0)
                            + jnp.where(lane_i == 2, cn, 0.0)
                            + jnp.where(lane_i == 3, ps, 0.0)
                            + jnp.where(lane_i == 4, nm, 0.0))

    return kernel


class FCOSLoss:
    """JAX/Pallas port of the PyTorch FCOSLoss forward pass."""

    def __init__(self, loss_alpha=0.25, loss_gamma=2.0, iou_loss_type='IoU', reg_weights=1.0):
        self.loss_alpha = loss_alpha
        self.loss_gamma = loss_gamma
        self.iou_loss_type = iou_loss_type
        self.reg_weights = reg_weights  # stored but unused in forward (matches reference)

    @staticmethod
    def _pred_cm(x):
        # NCHW -> (C, N*H*W) channel-major directly; anchor order (n, h, w) is
        # identical to the reference permute(0,2,3,1).reshape(-1, C), without
        # materializing the row-major (M, C) intermediate + extra transpose.
        n, c, h, w = x.shape
        return jnp.transpose(jnp.reshape(x, (n, c, h * w)), (1, 0, 2)).reshape(c, n * h * w)

    @staticmethod
    def _tgt_cm(x):
        # NHWC -> (C, N*H*W), anchor order (n, h, w)
        n, h, w, c = x.shape
        return jnp.reshape(x, (n * h * w, c)).T

    def __call__(self, cls_logits, bboxes_reg, centerness, tag_labels, tag_bboxes, tag_center):
        num_lvl = len(cls_logits)
        rev = [num_lvl - 1 - l for l in range(num_lvl)]   # predictions: reversed level order
        cls_cm = jnp.concatenate([self._pred_cm(cls_logits[l]) for l in rev], 1).astype(jnp.float32)
        reg_cm = jnp.concatenate([self._pred_cm(bboxes_reg[l]) for l in rev], 1).astype(jnp.float32)
        ctn_cm = jnp.concatenate([self._pred_cm(centerness[l]) for l in rev], 1).astype(jnp.float32)
        lbl_cm = jnp.concatenate([self._tgt_cm(tag_labels[l]) for l in range(num_lvl)], 1).astype(jnp.float32)
        box_cm = jnp.concatenate([self._tgt_cm(tag_bboxes[l]) for l in range(num_lvl)], 1).astype(jnp.float32)
        cen_cm = jnp.concatenate([self._tgt_cm(tag_center[l]) for l in range(num_lvl)], 1).astype(jnp.float32)

        C, M = cls_cm.shape

        # ---- tiling: anchor axis -> (rows, 128); block = (channels, TB, 128) ----
        r_needed = _cdiv(M, 128)
        bytes_per_row = (C + 11) * 128 * 4            # cls C + bbox 4+4 + lbl/ctn/cen 3, f32
        per_row = bytes_per_row * 2 + 5 * 128 * 4     # double-buffered inputs + 5 accumulators
        tb = (12 * 1024 * 1024) // per_row            # fits every chip's default scoped VMEM
        tb = max(8, min(256, (tb // 8) * 8))
        tb = min(tb, ((r_needed + 7) // 8) * 8)       # don't over-pad tiny inputs
        nb_total = _cdiv(r_needed, tb)
        splits = 2 if nb_total >= 2 else 1            # use both TensorCores on v7x
        nb_per = _cdiv(nb_total, splits)
        rows = splits * nb_per * tb
        pad = rows * 128 - M

        def to_slab(x):
            ch = x.shape[0]
            return jnp.pad(x, ((0, 0), (0, pad))).reshape(ch, rows, 128)

        def spec(ch):
            return pl.BlockSpec((ch, tb, 128), lambda s, i: (0, s * nb_per + i, 0))

        out = pl.pallas_call(
            _make_kernel(self.loss_alpha, self.loss_gamma, self.iou_loss_type, M, tb),
            out_shape=jax.ShapeDtypeStruct((splits, 128), jnp.float32),
            grid_spec=pltpu.PrefetchScalarGridSpec(
                num_scalar_prefetch=0,
                grid=(splits, nb_per),
                in_specs=[spec(C), spec(1), spec(4), spec(4), spec(1), spec(1)],
                out_specs=pl.BlockSpec((1, 128), lambda s, i: (s, 0)),
                scratch_shapes=[pltpu.VMEM((tb, 128), jnp.float32)] * 5,
            ),
            compiler_params=pltpu.CompilerParams(
                dimension_semantics=("parallel", "arbitrary"),
                vmem_limit_bytes=32 * 1024 * 1024,
            ),
        )(to_slab(cls_cm), to_slab(lbl_cm), to_slab(reg_cm),
          to_slab(box_cm), to_slab(ctn_cm), to_slab(cen_cm))

        sums = jnp.sum(out, axis=0)                   # combine the two TC partials
        focal_sum = sums[0]
        reg_sum = sums[1]
        ctn_sum = sums[2]
        num_positive_fp32 = sums[3]
        normalize_sum = sums[4]
        # NOTE: num_positive_int32 = num_positive*0 + 1 in the reference is dead code.

        cls_loss = focal_sum / num_positive_fp32
        reg_loss = reg_sum / normalize_sum
        ctn_loss = ctn_sum / num_positive_fp32
        total_loss = ctn_loss + cls_loss + reg_loss
        return {'total_loss': total_loss, 'loss_centerness': ctn_loss,
                'loss_cls': cls_loss, 'loss_box': reg_loss}


def fcos_loss_ref(cls_logits, bboxes_reg, centerness, tag_labels, tag_bboxes, tag_center,
                  alpha=0.25, gamma=2.0, iou_loss_type='IoU'):
    """Pure-JAX mirror of the PyTorch forward, used only for validation."""
    def flat(x, cf):
        if cf:
            x = jnp.transpose(x, (0, 2, 3, 1))
        return jnp.reshape(x, (-1, x.shape[3]))

    n = len(cls_logits)
    cls_f = jnp.concatenate([flat(cls_logits[n - 1 - l], True) for l in range(n)], 0)
    reg_f = jnp.concatenate([flat(bboxes_reg[n - 1 - l], True) for l in range(n)], 0)
    ctn_f = jnp.concatenate([flat(centerness[n - 1 - l], True) for l in range(n)], 0)
    lbl_f = jnp.concatenate([flat(tag_labels[l], False) for l in range(n)], 0)
    box_f = jnp.concatenate([flat(tag_bboxes[l], False) for l in range(n)], 0)
    cen_f = jnp.concatenate([flat(tag_center[l], False) for l in range(n)], 0)

    mask = (lbl_f > 0).astype(jnp.float32)                        # (M, 1)
    num_pos = mask.sum()
    norm_sum = (cen_f * mask).sum()
    C = cls_f.shape[-1]
    onehot = jax.nn.one_hot(lbl_f[:, 0].astype(jnp.int32), C + 1)[:, 1:]
    p = jax.nn.sigmoid(cls_f)
    focal = (onehot * (-jnp.log(p + _EPS)) * _pow(1.0 - p, gamma) * alpha
             + (1.0 - onehot) * (-jnp.log(1.0 - p + _EPS)) * _pow(p, gamma) * (1.0 - alpha)).sum()
    cls_loss = focal / num_pos

    m = mask[:, 0]
    w = cen_f[:, 0]
    pred = reg_f * mask
    tgt = box_f * mask
    plw, pth, prw, pbh = pred[:, 0], pred[:, 1], pred[:, 2], pred[:, 3]
    tlw, tth, trw, tbh = tgt[:, 0], tgt[:, 1], tgt[:, 2], tgt[:, 3]
    ilw, irw = jnp.minimum(plw, tlw), jnp.minimum(prw, trw)
    ith, ibh = jnp.minimum(pth, tth), jnp.minimum(pbh, tbh)
    clw, crw = jnp.maximum(plw, tlw), jnp.maximum(prw, trw)
    cth, cbh = jnp.maximum(pth, tth), jnp.maximum(pbh, tbh)
    area_p = (plw + prw) * (pth + pbh)
    area_t = (tlw + trw) * (tth + tbh)
    area_i = (ilw + irw) * (ith + ibh)
    ious = (area_i + 1.0) / (area_p + area_t - area_i + 1.0) * m
    t = iou_loss_type.lower()
    if t == 'linear_iou':
        loss = 1.0 - ious
    elif t == 'giou':
        area_u = area_p + area_t - area_i
        area_c = (clw + crw) * (cth + cbh) + 1e-7
        loss = 1.0 - (ious - (area_c - area_u) / area_c)
    else:
        loss = 0.0 - jnp.log(ious)
    reg_loss = (loss * w * m / norm_sum).sum()

    pc = jax.nn.sigmoid(ctn_f[:, 0])
    bce = w * (-jnp.log(pc + _EPS)) + (1.0 - w) * (-jnp.log(1.0 - pc + _EPS))
    ctn_loss = (bce * m / num_pos).sum()
    total = ctn_loss + cls_loss + reg_loss
    return {'total_loss': total, 'loss_centerness': ctn_loss,
            'loss_cls': cls_loss, 'loss_box': reg_loss}


if __name__ == "__main__":
    key = jax.random.PRNGKey(0)
    N, C = 2, 8
    level_hw = [(16, 16), (8, 8), (4, 4)]   # predictions: large -> small receptive field

    cls_logits, bboxes_reg, centerness = [], [], []
    for (h, w) in level_hw:
        key, k1, k2, k3 = jax.random.split(key, 4)
        cls_logits.append(jax.random.normal(k1, (N, C, h, w), jnp.float32) * 0.5)
        bboxes_reg.append(jax.random.uniform(k2, (N, 4, h, w), jnp.float32, 0.1, 3.0))
        centerness.append(jax.random.normal(k3, (N, 1, h, w), jnp.float32) * 0.5)

    tag_labels, tag_bboxes, tag_center = [], [], []
    for (h, w) in reversed(level_hw):        # targets: small -> large receptive field
        key, k4, k5, k6 = jax.random.split(key, 4)
        # All-positive labels in [1, C]: the reference IoU branch takes log(0)
        # (-> inf/nan) for negative samples, so a clean finite check needs positives.
        tag_labels.append(jax.random.randint(k4, (N, h, w, 1), 1, C + 1).astype(jnp.float32))
        tag_bboxes.append(jax.random.uniform(k5, (N, h, w, 4), jnp.float32, 0.1, 3.0))
        tag_center.append(jax.random.uniform(k6, (N, h, w, 1), jnp.float32, 0.05, 1.0))

    loss_fn = FCOSLoss(loss_alpha=0.25, loss_gamma=2.0, iou_loss_type='IoU', reg_weights=1.0)
    out = loss_fn(cls_logits, bboxes_reg, centerness, tag_labels, tag_bboxes, tag_center)
    out = {k: jax.block_until_ready(v) for k, v in out.items()}

    ref = fcos_loss_ref(cls_logits, bboxes_reg, centerness, tag_labels, tag_bboxes, tag_center,
                        alpha=0.25, gamma=2.0, iou_loss_type='IoU')
    for k in ('total_loss', 'loss_centerness', 'loss_cls', 'loss_box'):
        assert jnp.allclose(out[k], ref[k], rtol=1e-3, atol=1e-4), (k, out[k], ref[k])

    print("KERNEL_OK")
</pallas_src>

<mosaic_0001>
module attributes {stable_mosaic.version = 11 : i64} {
  func.func @kernel(%arg0: i32, %arg1: i32, %arg2: memref<8x8x128xf32, #tpu.memory_space<vmem>>, %arg3: memref<1x8x128xf32, #tpu.memory_space<vmem>>, %arg4: memref<4x8x128xf32, #tpu.memory_space<vmem>>, %arg5: memref<4x8x128xf32, #tpu.memory_space<vmem>>, %arg6: memref<1x8x128xf32, #tpu.memory_space<vmem>>, %arg7: memref<1x8x128xf32, #tpu.memory_space<vmem>>, %arg8: memref<1x128xf32, #tpu.memory_space<vmem>>, %arg9: memref<8x128xf32, #tpu.memory_space<vmem>>, %arg10: memref<8x128xf32, #tpu.memory_space<vmem>>, %arg11: memref<8x128xf32, #tpu.memory_space<vmem>>, %arg12: memref<8x128xf32, #tpu.memory_space<vmem>>, %arg13: memref<8x128xf32, #tpu.memory_space<vmem>>) attributes {dimension_semantics = [#tpu.dimension_semantics<parallel>, #tpu.dimension_semantics<arbitrary>], iteration_bounds = array<i64: 1, 1>, scalar_prefetch = 0 : i64, scratch_operands = 5 : i64, tpu.core_type = #tpu.core_type<tc>, window_params = [{transform_indices = @transform_0, window_bounds = array<i64: 8, 8, 128>}, {transform_indices = @transform_1, window_bounds = array<i64: 1, 8, 128>}, {transform_indices = @transform_2, window_bounds = array<i64: 4, 8, 128>}, {transform_indices = @transform_3, window_bounds = array<i64: 4, 8, 128>}, {transform_indices = @transform_4, window_bounds = array<i64: 1, 8, 128>}, {transform_indices = @transform_5, window_bounds = array<i64: 1, 8, 128>}, {transform_indices = @transform_6, window_bounds = array<i64: 1, 128>}]} {
    %c0_i32 = arith.constant 0 : i32
    %0 = arith.cmpi eq, %arg1, %c0_i32 : i32
    %1 = arith.extui %0 : i1 to i32
    %c0_i32_0 = arith.constant 0 : i32
    %2 = arith.cmpi ne, %1, %c0_i32_0 : i32
    scf.if %2 {
      %cst_60 = arith.constant 0.000000e+00 : f32
      %155 = vector.broadcast %cst_60 : f32 to vector<8x128xf32>
      %c0_61 = arith.constant 0 : index
      %c0_62 = arith.constant 0 : index
      %156 = vector.load %arg9[%c0_61, %c0_62] : memref<8x128xf32, #tpu.memory_space<vmem>>, vector<8x128xf32>
      tpu.vector_store %arg9[%c0_61, %c0_62], %155 {strides = array<i32>} : memref<8x128xf32, #tpu.memory_space<vmem>>, vector<8x128xf32>,
      %cst_63 = arith.constant 0.000000e+00 : f32
      %157 = vector.broadcast %cst_63 : f32 to vector<8x128xf32>
      %c0_64 = arith.constant 0 : index
      %c0_65 = arith.constant 0 : index
      %158 = vector.load %arg10[%c0_64, %c0_65] : memref<8x128xf32, #tpu.memory_space<vmem>>, vector<8x128xf32>
      tpu.vector_store %arg10[%c0_64, %c0_65], %157 {strides = array<i32>} : memref<8x128xf32, #tpu.memory_space<vmem>>, vector<8x128xf32>,
      %cst_66 = arith.constant 0.000000e+00 : f32
      %159 = vector.broadcast %cst_66 : f32 to vector<8x128xf32>
      %c0_67 = arith.constant 0 : index
      %c0_68 = arith.constant 0 : index
      %160 = vector.load %arg11[%c0_67, %c0_68] : memref<8x128xf32, #tpu.memory_space<vmem>>, vector<8x128xf32>
      tpu.vector_store %arg11[%c0_67, %c0_68], %159 {strides = array<i32>} : memref<8x128xf32, #tpu.memory_space<vmem>>, vector<8x128xf32>,
      %cst_69 = arith.constant 0.000000e+00 : f32
      %161 = vector.broadcast %cst_69 : f32 to vector<8x128xf32>
      %c0_70 = arith.constant 0 : index
      %c0_71 = arith.constant 0 : index
      %162 = vector.load %arg12[%c0_70, %c0_71] : memref<8x128xf32, #tpu.memory_space<vmem>>, vector<8x128xf32>
      tpu.vector_store %arg12[%c0_70, %c0_71], %161 {strides = array<i32>} : memref<8x128xf32, #tpu.memory_space<vmem>>, vector<8x128xf32>,
      %cst_72 = arith.constant 0.000000e+00 : f32
      %163 = vector.broadcast %cst_72 : f32 to vector<8x128xf32>
      %c0_73 = arith.constant 0 : index
      %c0_74 = arith.constant 0 : index
      %164 = vector.load %arg13[%c0_73, %c0_74] : memref<8x128xf32, #tpu.memory_space<vmem>>, vector<8x128xf32>
      tpu.vector_store %arg13[%c0_73, %c0_74], %163 {strides = array<i32>} : memref<8x128xf32, #tpu.memory_space<vmem>>, vector<8x128xf32>,
    } else {
    }
    %c0 = arith.constant 0 : index
    %c0_1 = arith.constant 0 : index
    %c0_2 = arith.constant 0 : index
    %3 = vector.load %arg3[%c0, %c0_1, %c0_2] : memref<1x8x128xf32, #tpu.memory_space<vmem>>, vector<1x8x128xf32>
    %4 = vector.shape_cast %3 : vector<1x8x128xf32> to vector<8x128xf32>
    %c0_3 = arith.constant 0 : index
    %c0_4 = arith.constant 0 : index
    %c0_5 = arith.constant 0 : index
    %5 = vector.load %arg7[%c0_3, %c0_4, %c0_5] : memref<1x8x128xf32, #tpu.memory_space<vmem>>, vector<1x8x128xf32>
    %6 = vector.shape_cast %5 : vector<1x8x128xf32> to vector<8x128xf32>
    %cst = arith.constant 0.000000e+00 : f32
    %7 = vector.broadcast %cst : f32 to vector<8x128xf32>
    %8 = arith.cmpf ogt, %4, %7 : vector<8x128xf32>
    %9 = arith.extui %8 : vector<8x128xi1> to vector<8x128xi32>
    %10 = arith.sitofp %9 : vector<8x128xi32> to vector<8x128xf32>
    %11 = tpu.iota {dimensions = array<i32: 0>} : vector<8x128xi32>
    %12 = tpu.iota {dimensions = array<i32: 1>} : vector<8x128xi32>
    %c1_i32 = arith.constant 1 : i32
    %13 = arith.muli %arg0, %c1_i32 : i32
    %14 = arith.addi %13, %arg1 : i32
    %c8_i32 = arith.constant 8 : i32
    %15 = arith.muli %14, %c8_i32 : i32
    %16 = vector.broadcast %15 : i32 to vector<8x128xi32>
    %17 = arith.addi %16, %11 : vector<8x128xi32>
    %c128_i32 = arith.constant 128 : i32
    %18 = vector.broadcast %c128_i32 : i32 to vector<8x128xi32>
    %19 = arith.muli %17, %18 : vector<8x128xi32>
    %20 = arith.addi %19, %12 : vector<8x128xi32>
    %c672_i32 = arith.constant 672 : i32
    %21 = vector.broadcast %c672_i32 : i32 to vector<8x128xi32>
    %22 = arith.cmpi slt, %20, %21 : vector<8x128xi32>
    %23 = arith.extui %22 : vector<8x128xi1> to vector<8x128xi32>
    %24 = arith.sitofp %23 : vector<8x128xi32> to vector<8x128xf32>
    %c0_6 = arith.constant 0 : index
    %c0_7 = arith.constant 0 : index
    %c0_8 = arith.constant 0 : index
    %25 = vector.load %arg2[%c0_6, %c0_7, %c0_8] : memref<8x8x128xf32, #tpu.memory_space<vmem>>, vector<8x8x128xf32>
    %26 = tpu.iota {dimensions = array<i32: 0>} : vector<8x8x128xi32>
    %c1_i32_9 = arith.constant 1 : i32
    %27 = vector.broadcast %c1_i32_9 : i32 to vector<8x8x128xi32>
    %28 = arith.addi %26, %27 : vector<8x8x128xi32>
    %29 = arith.fptosi %4 : vector<8x128xf32> to vector<8x128xi32>
    %30 = vector.shape_cast %29 : vector<8x128xi32> to vector<1x8x128xi32>
    %31 = vector.broadcast %30 : vector<1x8x128xi32> to vector<8x8x128xi32>
    %32 = arith.cmpi eq, %31, %28 : vector<8x8x128xi32>
    %33 = arith.negf %25 : vector<8x8x128xf32>
    %34 = math.exp %33 : vector<8x8x128xf32>
    %cst_10 = arith.constant 1.000000e+00 : f32
    %35 = vector.broadcast %cst_10 : f32 to vector<8x8x128xf32>
    %36 = arith.addf %35, %34 : vector<8x8x128xf32>
    %37 = arith.divf %35, %36 : vector<8x8x128xf32>
    %cst_11 = arith.constant 1.000000e+00 : f32
    %38 = vector.broadcast %cst_11 : f32 to vector<8x8x128xf32>
    %39 = arith.subf %38, %37 : vector<8x8x128xf32>
    %cst_12 = arith.constant 2.500000e-01 : f32
    %cst_13 = arith.constant 7.500000e-01 : f32
    %40 = vector.broadcast %cst_12 : f32 to vector<8x8x128xf32>
    %41 = vector.broadcast %cst_13 : f32 to vector<8x8x128xf32>
    %42 = arith.select %32, %40, %41 : vector<8x8x128xi1>, vector<8x8x128xf32>
    %43 = arith.select %32, %39, %37 : vector<8x8x128xi1>, vector<8x8x128xf32>
    %44 = arith.select %32, %37, %39 : vector<8x8x128xi1>, vector<8x8x128xf32>
    %45 = arith.mulf %43, %43 : vector<8x8x128xf32>
    %46 = arith.mulf %42, %45 : vector<8x8x128xf32>
    %cst_14 = arith.constant 9.99999971E-10 : f32
    %47 = vector.broadcast %cst_14 : f32 to vector<8x8x128xf32>
    %48 = arith.addf %44, %47 : vector<8x8x128xf32>
    %49 = math.log %48 : vector<8x8x128xf32>
    %cst_15 = arith.constant 0.000000e+00 : f32
    %50 = vector.broadcast %cst_15 : f32 to vector<8x8x128xf32>
    %51 = arith.subf %50, %49 : vector<8x8x128xf32>
    %52 = arith.mulf %46, %51 : vector<8x8x128xf32>
    %c0_16 = arith.constant 0 : index
    %c0_17 = arith.constant 0 : index
    %53 = vector.load %arg9[%c0_16, %c0_17] : memref<8x128xf32, #tpu.memory_space<vmem>>, vector<8x128xf32>
    %cst_18 = arith.constant dense<0.000000e+00> : vector<8x128xf32>
    %54 = vector.multi_reduction <add>, %52, %cst_18 [0] : vector<8x8x128xf32> to vector<8x128xf32>
    %55 = arith.mulf %54, %24 : vector<8x128xf32>
    %56 = arith.addf %53, %55 : vector<8x128xf32>
    %c0_19 = arith.constant 0 : index
    %c0_20 = arith.constant 0 : index
    %57 = vector.load %arg9[%c0_19, %c0_20] : memref<8x128xf32, #tpu.memory_space<vmem>>, vector<8x128xf32>
    tpu.vector_store %arg9[%c0_19, %c0_20], %56 {strides = array<i32>} : memref<8x128xf32, #tpu.memory_space<vmem>>, vector<8x128xf32>,
    %c0_21 = arith.constant 0 : index
    %c0_22 = arith.constant 0 : index
    %c0_23 = arith.constant 0 : index
    %58 = vector.load %arg4[%c0_21, %c0_22, %c0_23] : memref<4x8x128xf32, #tpu.memory_space<vmem>>, vector<4x8x128xf32>
    %c0_24 = arith.constant 0 : index
    %c0_25 = arith.constant 0 : index
    %c0_26 = arith.constant 0 : index
    %59 = vector.load %arg5[%c0_24, %c0_25, %c0_26] : memref<4x8x128xf32, #tpu.memory_space<vmem>>, vector<4x8x128xf32>
    %60 = vector.extract_strided_slice %58 {offsets = [0, 0, 0], sizes = [1, 8, 128], strides = [1, 1, 1]} : vector<4x8x128xf32> to vector<1x8x128xf32>
    %61 = vector.shape_cast %60 : vector<1x8x128xf32> to vector<8x128xf32>
    %62 = arith.mulf %61, %10 : vector<8x128xf32>
    %63 = vector.extract_strided_slice %58 {offsets = [1, 0, 0], sizes = [1, 8, 128], strides = [1, 1, 1]} : vector<4x8x128xf32> to vector<1x8x128xf32>
    %64 = vector.shape_cast %63 : vector<1x8x128xf32> to vector<8x128xf32>
    %65 = arith.mulf %64, %10 : vector<8x128xf32>
    %66 = vector.extract_strided_slice %58 {offsets = [2, 0, 0], sizes = [1, 8, 128], strides = [1, 1, 1]} : vector<4x8x128xf32> to vector<1x8x128xf32>
    %67 = vector.shape_cast %66 : vector<1x8x128xf32> to vector<8x128xf32>
    %68 = arith.mulf %67, %10 : vector<8x128xf32>
    %69 = vector.extract_strided_slice %58 {offsets = [3, 0, 0], sizes = [1, 8, 128], strides = [1, 1, 1]} : vector<4x8x128xf32> to vector<1x8x128xf32>
    %70 = vector.shape_cast %69 : vector<1x8x128xf32> to vector<8x128xf32>
    %71 = arith.mulf %70, %10 : vector<8x128xf32>
    %72 = vector.extract_strided_slice %59 {offsets = [0, 0, 0], sizes = [1, 8, 128], strides = [1, 1, 1]} : vector<4x8x128xf32> to vector<1x8x128xf32>
    %73 = vector.shape_cast %72 : vector<1x8x128xf32> to vector<8x128xf32>
    %74 = arith.mulf %73, %10 : vector<8x128xf32>
    %75 = vector.extract_strided_slice %59 {offsets = [1, 0, 0], sizes = [1, 8, 128], strides = [1, 1, 1]} : vector<4x8x128xf32> to vector<1x8x128xf32>
    %76 = vector.shape_cast %75 : vector<1x8x128xf32> to vector<8x128xf32>
    %77 = arith.mulf %76, %10 : vector<8x128xf32>
    %78 = vector.extract_strided_slice %59 {offsets = [2, 0, 0], sizes = [1, 8, 128], strides = [1, 1, 1]} : vector<4x8x128xf32> to vector<1x8x128xf32>
    %79 = vector.shape_cast %78 : vector<1x8x128xf32> to vector<8x128xf32>
    %80 = arith.mulf %79, %10 : vector<8x128xf32>
    %81 = vector.extract_strided_slice %59 {offsets = [3, 0, 0], sizes = [1, 8, 128], strides = [1, 1, 1]} : vector<4x8x128xf32> to vector<1x8x128xf32>
    %82 = vector.shape_cast %81 : vector<1x8x128xf32> to vector<8x128xf32>
    %83 = arith.mulf %82, %10 : vector<8x128xf32>
    %84 = arith.minimumf %62, %74 : vector<8x128xf32>
    %85 = arith.minimumf %68, %80 : vector<8x128xf32>
    %86 = arith.minimumf %65, %77 : vector<8x128xf32>
    %87 = arith.minimumf %71, %83 : vector<8x128xf32>
    %88 = arith.addf %62, %68 : vector<8x128xf32>
    %89 = arith.addf %65, %71 : vector<8x128xf32>
    %90 = arith.mulf %88, %89 : vector<8x128xf32>
    %91 = arith.addf %74, %80 : vector<8x128xf32>
    %92 = arith.addf %77, %83 : vector<8x128xf32>
    %93 = arith.mulf %91, %92 : vector<8x128xf32>
    %94 = arith.addf %84, %85 : vector<8x128xf32>
    %95 = arith.addf %86, %87 : vector<8x128xf32>
    %96 = arith.mulf %94, %95 : vector<8x128xf32>
    %cst_27 = arith.constant 1.000000e+00 : f32
    %97 = vector.broadcast %cst_27 : f32 to vector<8x128xf32>
    %98 = arith.addf %96, %97 : vector<8x128xf32>
    %99 = arith.addf %90, %93 : vector<8x128xf32>
    %100 = arith.subf %99, %96 : vector<8x128xf32>
    %cst_28 = arith.constant 1.000000e+00 : f32
    %101 = vector.broadcast %cst_28 : f32 to vector<8x128xf32>
    %102 = arith.addf %100, %101 : vector<8x128xf32>
    %103 = arith.divf %98, %102 : vector<8x128xf32>
    %104 = arith.mulf %103, %10 : vector<8x128xf32>
    %cst_29 = arith.constant 0.000000e+00 : f32
    %105 = vector.broadcast %cst_29 : f32 to vector<8x128xf32>
    %106 = arith.cmpf ogt, %24, %105 : vector<8x128xf32>
    %cst_30 = arith.constant 1.000000e+00 : f32
    %107 = vector.broadcast %cst_30 : f32 to vector<8x128xf32>
    %108 = arith.select %106, %104, %107 : vector<8x128xi1>, vector<8x128xf32>
    %109 = math.log %108 : vector<8x128xf32>
    %cst_31 = arith.constant 0.000000e+00 : f32
    %110 = vector.broadcast %cst_31 : f32 to vector<8x128xf32>
    %111 = arith.subf %110, %109 : vector<8x128xf32>
    %c0_32 = arith.constant 0 : index
    %c0_33 = arith.constant 0 : index
    %112 = vector.load %arg10[%c0_32, %c0_33] : memref<8x128xf32, #tpu.memory_space<vmem>>, vector<8x128xf32>
    %113 = arith.mulf %111, %6 : vector<8x128xf32>
    %114 = arith.mulf %113, %10 : vector<8x128xf32>
    %115 = arith.addf %112, %114 : vector<8x128xf32>
    %c0_34 = arith.constant 0 : index
    %c0_35 = arith.constant 0 : index
    %116 = vector.load %arg10[%c0_34, %c0_35] : memref<8x128xf32, #tpu.memory_space<vmem>>, vector<8x128xf32>
    tpu.vector_store %arg10[%c0_34, %c0_35], %115 {strides = array<i32>} : memref<8x128xf32, #tpu.memory_space<vmem>>, vector<8x128xf32>,
    %c0_36 = arith.constant 0 : index
    %c0_37 = arith.constant 0 : index
    %c0_38 = arith.constant 0 : index
    %117 = vector.load %arg6[%c0_36, %c0_37, %c0_38] : memref<1x8x128xf32, #tpu.memory_space<vmem>>, vector<1x8x128xf32>
    %118 = vector.shape_cast %117 : vector<1x8x128xf32> to vector<8x128xf32>
    %119 = arith.negf %118 : vector<8x128xf32>
    %120 = math.exp %119 : vector<8x128xf32>
    %cst_39 = arith.constant 1.000000e+00 : f32
    %121 = vector.broadcast %cst_39 : f32 to vector<8x128xf32>
    %122 = arith.addf %121, %120 : vector<8x128xf32>
    %123 = arith.divf %121, %122 : vector<8x128xf32>
    %cst_40 = arith.constant 9.99999971E-10 : f32
    %124 = vector.broadcast %cst_40 : f32 to vector<8x128xf32>
    %125 = arith.addf %123, %124 : vector<8x128xf32>
    %126 = math.log %125 : vector<8x128xf32>
    %cst_41 = arith.constant 0.000000e+00 : f32
    %127 = vector.broadcast %cst_41 : f32 to vector<8x128xf32>
    %128 = arith.subf %127, %126 : vector<8x128xf32>
    %129 = arith.mulf %6, %128 : vector<8x128xf32>
    %cst_42 = arith.constant 1.000000e+00 : f32
    %130 = vector.broadcast %cst_42 : f32 to vector<8x128xf32>
    %131 = arith.subf %130, %6 : vector<8x128xf32>
    %cst_43 = arith.constant 1.000000e+00 : f32
    %132 = vector.broadcast %cst_43 : f32 to vector<8x128xf32>
    %133 = arith.subf %132, %123 : vector<8x128xf32>
    %cst_44 = arith.constant 9.99999971E-10 : f32
    %134 = vector.broadcast %cst_44 : f32 to vector<8x128xf32>
    %135 = arith.addf %133, %134 : vector<8x128xf32>
    %136 = math.log %135 : vector<8x128xf32>
    %cst_45 = arith.constant 0.000000e+00 : f32
    %137 = vector.broadcast %cst_45 : f32 to vector<8x128xf32>
    %138 = arith.subf %137, %136 : vector<8x128xf32>
    %139 = arith.mulf %131, %138 : vector<8x128xf32>
    %140 = arith.addf %129, %139 : vector<8x128xf32>
    %c0_46 = arith.constant 0 : index
    %c0_47 = arith.constant 0 : index
    %141 = vector.load %arg11[%c0_46, %c0_47] : memref<8x128xf32, #tpu.memory_space<vmem>>, vector<8x128xf32>
    %142 = arith.mulf %140, %10 : vector<8x128xf32>
    %143 = arith.addf %141, %142 : vector<8x128xf32>
    %c0_48 = arith.constant 0 : index
    %c0_49 = arith.constant 0 : index
    %144 = vector.load %arg11[%c0_48, %c0_49] : memref<8x128xf32, #tpu.memory_space<vmem>>, vector<8x128xf32>
    tpu.vector_store %arg11[%c0_48, %c0_49], %143 {strides = array<i32>} : memref<8x128xf32, #tpu.memory_space<vmem>>, vector<8x128xf32>,
    %c0_50 = arith.constant 0 : index
    %c0_51 = arith.constant 0 : index
    %145 = vector.load %arg12[%c0_50, %c0_51] : memref<8x128xf32, #tpu.memory_space<vmem>>, vector<8x128xf32>
    %146 = arith.addf %145, %10 : vector<8x128xf32>
    %c0_52 = arith.constant 0 : index
    %c0_53 = arith.constant 0 : index
    %147 = vector.load %arg12[%c0_52, %c0_53] : memref<8x128xf32, #tpu.memory_space<vmem>>, vector<8x128xf32>
    tpu.vector_store %arg12[%c0_52, %c0_53], %146 {strides = array<i32>} : memref<8x128xf32, #tpu.memory_space<vmem>>, vector<8x128xf32>,
    %c0_54 = arith.constant 0 : index
    %c0_55 = arith.constant 0 : index
    %148 = vector.load %arg13[%c0_54, %c0_55] : memref<8x128xf32, #tpu.memory_space<vmem>>, vector<8x128xf32>
    %149 = arith.mulf %6, %10 : vector<8x128xf32>
    %150 = arith.addf %148, %149 : vector<8x128xf32>
    %c0_56 = arith.constant 0 : index
    %c0_57 = arith.constant 0 : index
    %151 = vector.load %arg13[%c0_56, %c0_57] : memref<8x128xf32, #tpu.memory_space<vmem>>, vector<8x128xf32>
    tpu.vector_store %arg13[%c0_56, %c0_57], %150 {strides = array<i32>} : memref<8x128xf32, #tpu.memory_space<vmem>>, vector<8x128xf32>,
    %c0_i32_58 = arith.constant 0 : i32
    %152 = arith.cmpi eq, %arg1, %c0_i32_58 : i32
    %153 = arith.extui %152 : i1 to i32
    %c0_i32_59 = arith.constant 0 : i32
    %154 = arith.cmpi ne, %153, %c0_i32_59 : i32
    scf.if %154 {
      %c0_60 = arith.constant 0 : index
      %c0_61 = arith.constant 0 : index
      %155 = vector.load %arg9[%c0_60, %c0_61] : memref<8x128xf32, #tpu.memory_space<vmem>>, vector<8x128xf32>
      %156 = vector.shape_cast %155 : vector<8x128xf32> to vector<1x8x128xf32>
      %cst_62 = arith.constant dense<0.000000e+00> : vector<1xf32>
      %157 = vector.multi_reduction <add>, %156, %cst_62 [1, 2] : vector<1x8x128xf32> to vector<1xf32>
      %158 = vector.shape_cast %157 : vector<1xf32> to vector<1x1x1xf32>
      %159 = vector.extract %158[0, 0, 0] : f32 from vector<1x1x1xf32>
      %160 = vector.broadcast %159 : f32 to vector<1x1xf32>
      %c0_63 = arith.constant 0 : index
      %c0_64 = arith.constant 0 : index
      %161 = vector.load %arg10[%c0_63, %c0_64] : memref<8x128xf32, #tpu.memory_space<vmem>>, vector<8x128xf32>
      %162 = vector.shape_cast %161 : vector<8x128xf32> to vector<1x8x128xf32>
      %cst_65 = arith.constant dense<0.000000e+00> : vector<1xf32>
      %163 = vector.multi_reduction <add>, %162, %cst_65 [1, 2] : vector<1x8x128xf32> to vector<1xf32>
      %164 = vector.shape_cast %163 : vector<1xf32> to vector<1x1x1xf32>
      %165 = vector.extract %164[0, 0, 0] : f32 from vector<1x1x1xf32>
      %166 = vector.broadcast %165 : f32 to vector<1x1xf32>
      %c0_66 = arith.constant 0 : index
      %c0_67 = arith.constant 0 : index
      %167 = vector.load %arg11[%c0_66, %c0_67] : memref<8x128xf32, #tpu.memory_space<vmem>>, vector<8x128xf32>
      %168 = vector.shape_cast %167 : vector<8x128xf32> to vector<1x8x128xf32>
      %cst_68 = arith.constant dense<0.000000e+00> : vector<1xf32>
      %169 = vector.multi_reduction <add>, %168, %cst_68 [1, 2] : vector<1x8x128xf32> to vector<1xf32>
      %170 = vector.shape_cast %169 : vector<1xf32> to vector<1x1x1xf32>
      %171 = vector.extract %170[0, 0, 0] : f32 from vector<1x1x1xf32>
      %172 = vector.broadcast %171 : f32 to vector<1x1xf32>
      %c0_69 = arith.constant 0 : index
      %c0_70 = arith.constant 0 : index
      %173 = vector.load %arg12[%c0_69, %c0_70] : memref<8x128xf32, #tpu.memory_space<vmem>>, vector<8x128xf32>
      %174 = vector.shape_cast %173 : vector<8x128xf32> to vector<1x8x128xf32>
      %cst_71 = arith.constant dense<0.000000e+00> : vector<1xf32>
      %175 = vector.multi_reduction <add>, %174, %cst_71 [1, 2] : vector<1x8x128xf32> to vector<1xf32>
      %176 = vector.shape_cast %175 : vector<1xf32> to vector<1x1x1xf32>
      %177 = vector.extract %176[0, 0, 0] : f32 from vector<1x1x1xf32>
      %178 = vector.broadcast %177 : f32 to vector<1x1xf32>
      %c0_72 = arith.constant 0 : index
      %c0_73 = arith.constant 0 : index
      %179 = vector.load %arg13[%c0_72, %c0_73] : memref<8x128xf32, #tpu.memory_space<vmem>>, vector<8x128xf32>
      %180 = vector.shape_cast %179 : vector<8x128xf32> to vector<1x8x128xf32>
      %cst_74 = arith.constant dense<0.000000e+00> : vector<1xf32>
      %181 = vector.multi_reduction <add>, %180, %cst_74 [1, 2] : vector<1x8x128xf32> to vector<1xf32>
      %182 = vector.shape_cast %181 : vector<1xf32> to vector<1x1x1xf32>
      %183 = vector.extract %182[0, 0, 0] : f32 from vector<1x1x1xf32>
      %184 = vector.broadcast %183 : f32 to vector<1x1xf32>
      %185 = tpu.iota {dimensions = array<i32: 1>} : vector<1x128xi32>
      %c0_i32_75 = arith.constant 0 : i32
      %186 = vector.broadcast %c0_i32_75 : i32 to vector<1x128xi32>
      %187 = arith.cmpi eq, %185, %186 : vector<1x128xi32>
      %cst_76 = arith.constant 0.000000e+00 : f32
      %188 = vector.shape_cast %160 : vector<1x1xf32> to vector<1x1xf32>
      %189 = vector.broadcast %188 : vector<1x1xf32> to vector<1x128xf32>
      %190 = vector.broadcast %cst_76 : f32 to vector<1x128xf32>
      %191 = arith.select %187, %189, %190 : vector<1x128xi1>, vector<1x128xf32>
      %c1_i32_77 = arith.constant 1 : i32
      %192 = vector.broadcast %c1_i32_77 : i32 to vector<1x128xi32>
      %193 = arith.cmpi eq, %185, %192 : vector<1x128xi32>
      %cst_78 = arith.constant 0.000000e+00 : f32
      %194 = vector.shape_cast %166 : vector<1x1xf32> to vector<1x1xf32>
      %195 = vector.broadcast %194 : vector<1x1xf32> to vector<1x128xf32>
      %196 = vector.broadcast %cst_78 : f32 to vector<1x128xf32>
      %197 = arith.select %193, %195, %196 : vector<1x128xi1>, vector<1x128xf32>
      %198 = arith.addf %191, %197 : vector<1x128xf32>
      %c2_i32 = arith.constant 2 : i32
      %199 = vector.broadcast %c2_i32 : i32 to vector<1x128xi32>
      %200 = arith.cmpi eq, %185, %199 : vector<1x128xi32>
      %cst_79 = arith.constant 0.000000e+00 : f32
      %201 = vector.shape_cast %172 : vector<1x1xf32> to vector<1x1xf32>
      %202 = vector.broadcast %201 : vector<1x1xf32> to vector<1x128xf32>
      %203 = vector.broadcast %cst_79 : f32 to vector<1x128xf32>
      %204 = arith.select %200, %202, %203 : vector<1x128xi1>, vector<1x128xf32>
      %205 = arith.addf %198, %204 : vector<1x128xf32>
      %c3_i32 = arith.constant 3 : i32
      %206 = vector.broadcast %c3_i32 : i32 to vector<1x128xi32>
      %207 = arith.cmpi eq, %185, %206 : vector<1x128xi32>
      %cst_80 = arith.constant 0.000000e+00 : f32
      %208 = vector.shape_cast %178 : vector<1x1xf32> to vector<1x1xf32>
      %209 = vector.broadcast %208 : vector<1x1xf32> to vector<1x128xf32>
      %210 = vector.broadcast %cst_80 : f32 to vector<1x128xf32>
      %211 = arith.select %207, %209, %210 : vector<1x128xi1>, vector<1x128xf32>
      %212 = arith.addf %205, %211 : vector<1x128xf32>
      %c4_i32 = arith.constant 4 : i32
      %213 = vector.broadcast %c4_i32 : i32 to vector<1x128xi32>
      %214 = arith.cmpi eq, %185, %213 : vector<1x128xi32>
      %cst_81 = arith.constant 0.000000e+00 : f32
      %215 = vector.shape_cast %184 : vector<1x1xf32> to vector<1x1xf32>
      %216 = vector.broadcast %215 : vector<1x1xf32> to vector<1x128xf32>
      %217 = vector.broadcast %cst_81 : f32 to vector<1x128xf32>
      %218 = arith.select %214, %216, %217 : vector<1x128xi1>, vector<1x128xf32>
      %219 = arith.addf %212, %218 : vector<1x128xf32>
      %c0_82 = arith.constant 0 : index
      %c0_83 = arith.constant 0 : index
      %220 = vector.load %arg8[%c0_82, %c0_83] : memref<1x128xf32, #tpu.memory_space<vmem>>, vector<1x128xf32>
      tpu.vector_store %arg8[%c0_82, %c0_83], %219 {strides = array<i32>} : memref<1x128xf32, #tpu.memory_space<vmem>>, vector<1x128xf32>,
    } else {
    }
    return
  }
  func.func @transform_0(%arg0: i32, %arg1: i32) -> (i32, i32, i32) {
    %c1_i32 = arith.constant 1 : i32
    %0 = arith.muli %arg0, %c1_i32 : i32
    %1 = arith.addi %0, %arg1 : i32
    %c0_i32 = arith.constant 0 : i32
    %c0_i32_0 = arith.constant 0 : i32
    %c0_i32_1 = arith.constant 0 : i32
    return %c0_i32, %1, %c0_i32_0 : i32, i32, i32
  }
  func.func @transform_1(%arg0: i32, %arg1: i32) -> (i32, i32, i32) {
    %c1_i32 = arith.constant 1 : i32
    %0 = arith.muli %arg0, %c1_i32 : i32
    %1 = arith.addi %0, %arg1 : i32
    %c0_i32 = arith.constant 0 : i32
    %c0_i32_0 = arith.constant 0 : i32
    %c0_i32_1 = arith.constant 0 : i32
    return %c0_i32, %1, %c0_i32_0 : i32, i32, i32
  }
  func.func @transform_2(%arg0: i32, %arg1: i32) -> (i32, i32, i32) {
    %c1_i32 = arith.constant 1 : i32
    %0 = arith.muli %arg0, %c1_i32 : i32
    %1 = arith.addi %0, %arg1 : i32
    %c0_i32 = arith.constant 0 : i32
    %c0_i32_0 = arith.constant 0 : i32
    %c0_i32_1 = arith.constant 0 : i32
    return %c0_i32, %1, %c0_i32_0 : i32, i32, i32
  }
  func.func @transform_3(%arg0: i32, %arg1: i32) -> (i32, i32, i32) {
    %c1_i32 = arith.constant 1 : i32
    %0 = arith.muli %arg0, %c1_i32 : i32
    %1 = arith.addi %0, %arg1 : i32
    %c0_i32 = arith.constant 0 : i32
    %c0_i32_0 = arith.constant 0 : i32
    %c0_i32_1 = arith.constant 0 : i32
    return %c0_i32, %1, %c0_i32_0 : i32, i32, i32
  }
  func.func @transform_4(%arg0: i32, %arg1: i32) -> (i32, i32, i32) {
    %c1_i32 = arith.constant 1 : i32
    %0 = arith.muli %arg0, %c1_i32 : i32
    %1 = arith.addi %0, %arg1 : i32
    %c0_i32 = arith.constant 0 : i32
    %c0_i32_0 = arith.constant 0 : i32
    %c0_i32_1 = arith.constant 0 : i32
    return %c0_i32, %1, %c0_i32_0 : i32, i32, i32
  }
  func.func @transform_5(%arg0: i32, %arg1: i32) -> (i32, i32, i32) {
    %c1_i32 = arith.constant 1 : i32
    %0 = arith.muli %arg0, %c1_i32 : i32
    %1 = arith.addi %0, %arg1 : i32
    %c0_i32 = arith.constant 0 : i32
    %c0_i32_0 = arith.constant 0 : i32
    %c0_i32_1 = arith.constant 0 : i32
    return %c0_i32, %1, %c0_i32_0 : i32, i32, i32
  }
  func.func @transform_6(%arg0: i32, %arg1: i32) -> (i32, i32) {
    %c0_i32 = arith.constant 0 : i32
    %c0_i32_0 = arith.constant 0 : i32
    return %arg0, %c0_i32 : i32, i32
  }
}

</mosaic_0001>

<llo_original>
// kernel: tpu_custom_call.1
$region0: #{tpu_custom_call.1}
  #allocation0 [shape = 'u32[]', space=smem, size = 0x4, offset = 0x4, fixed_abs, tag = 'smem constant byte address 0x4 - core index']
  #allocation1 [shape = 'u32[144,128]{1,0:T(1,128)}', space=vmem, size = 0x12000, scoped, tag = 'internal scratch']
  #allocation2 [shape = 'f32[8,128]{1,0:T(8,128)}', space=vmem, size = 0x1000, scoped, tag = 'scratch operand']
  #allocation3 [shape = 'f32[8,128]{1,0:T(8,128)}', space=vmem, size = 0x1000, scoped, tag = 'scratch operand']
  #allocation4 [shape = 'f32[8,128]{1,0:T(8,128)}', space=vmem, size = 0x1000, scoped, tag = 'scratch operand']
  #allocation5 [shape = 'f32[8,128]{1,0:T(8,128)}', space=vmem, size = 0x1000, scoped, tag = 'scratch operand']
  #allocation6 [shape = 'f32[8,128]{1,0:T(8,128)}', space=vmem, size = 0x1000, scoped, tag = 'scratch operand']
  %s0 = inlined_call_operand.hbm [shape: f32[8,8,128], index: 0, kind: input, shape index: {}]
  %s1 = inlined_call_operand.hbm [shape: f32[1,8,128], index: 1, kind: input, shape index: {}]
  %s2 = inlined_call_operand.hbm [shape: f32[4,8,128], index: 2, kind: input, shape index: {}]
  %s3 = inlined_call_operand.hbm [shape: f32[4,8,128], index: 3, kind: input, shape index: {}]
  %s4 = inlined_call_operand.hbm [shape: f32[1,8,128], index: 4, kind: input, shape index: {}]
  %s5 = inlined_call_operand.vmem [shape: f32[1,8,128], index: 5, kind: input, shape index: {}]
  %s6 = inlined_call_operand.hbm [shape: f32[1,128], index: 6, kind: output, shape index: {}]
  %s7 = sld [smem:[#allocation0]]
  $region62: #{tpu_custom_call.1} parent=0
    _
  %s9 = ssub.s32 1, %s7
  %s10 = scalar_select 0, %s9, %s7
  $region1: #{tpu_custom_call.1} parent=0
    #allocation7 [shape = 'u8[32768]{0}', space=vmem, size = 0x8000, scoped, tag = 'input window, operand 0, single buffered']
    #allocation8 [shape = 's32[1]{0}', space=sflag, size = 0x4, scoped, tag = 'scoped memory for tpu_custom_call.1']
    #allocation9 [shape = 's32[1]{0}', space=sflag, size = 0x4, scoped, tag = 'scoped memory for tpu_custom_call.1']
    #allocation10 [shape = 'u8[4096]{0}', space=vmem, size = 0x1000, scoped, tag = 'input window, operand 1, single buffered']
    #allocation11 [shape = 's32[1]{0}', space=sflag, size = 0x4, scoped, tag = 'scoped memory for tpu_custom_call.1']
    #allocation12 [shape = 'u8[16384]{0}', space=vmem, size = 0x4000, scoped, tag = 'input window, operand 2, single buffered']
    #allocation13 [shape = 'u8[16384]{0}', space=vmem, size = 0x4000, scoped, tag = 'input window, operand 3, single buffered']
    #allocation14 [shape = 's32[1]{0}', space=sflag, size = 0x4, scoped, tag = 'scoped memory for tpu_custom_call.1']
    #allocation15 [shape = 'u8[4096]{0}', space=vmem, size = 0x1000, scoped, tag = 'input window, operand 4, single buffered']
    #allocation16 [shape = 'u8[512]{0}', space=vmem, size = 0x400, scoped, tag = 'output window, operand 0, single buffered']
    %11 = vsyncpa [#allocation8], 0
    %12 = vsyncpa [#allocation11], 0
    %13 = vsyncpa [#allocation14], 0
    %14 = vsyncpa [#allocation9], 0
    // Predicated region
    $region2: #{tpu_custom_call.1} parent=1 // pred_check
      _
    $region3: #{tpu_custom_call.1} parent=1 // pred_check_branch
      %16 = sbr.rel (0) target = $region5
    $region4: #{tpu_custom_call.1} parent=1 // pred_region
      %s17 = sadd.s32 0, 0
      %s19 = ssub.s32 1024, 1024
      %20 = vsyncadd [#allocation8], %s19
      %s21 = smul.addr %s17, 128
      %s22 = scalar_lea.hbm %s0, %s21
      %s23 = sshll.u32 [#allocation7], 4
      %s24 = int_to_ptr.vmem [resolvable:$true] %s23
      %29 = dma.hbm_to_vmem [thread:$0]  %s22, 1024, %s24, [#allocation8], 128, 128, 8
    $region5: #{tpu_custom_call.1} parent=1 // pred_fallthru
      _
    // Predicated region
    $region6: #{tpu_custom_call.1} parent=1 // pred_check
      _
    $region7: #{tpu_custom_call.1} parent=1 // pred_check_branch
      %31 = sbr.rel (0) target = $region9
    $region8: #{tpu_custom_call.1} parent=1 // pred_region
      %s32 = sadd.s32 0, 0
      %s34 = ssub.s32 128, 128
      %35 = vsyncadd [#allocation11], %s34
      %s36 = smul.addr %s32, 128
      %s37 = scalar_lea.hbm %s1, %s36
      %s39 = sshll.u32 [#allocation10], 4
      %s40 = int_to_ptr.vmem [resolvable:$true] %s39
      %42 = dma.hbm_to_vmem [thread:$0]  %s37, 128, %s40, [#allocation11]
    $region9: #{tpu_custom_call.1} parent=1 // pred_fallthru
      _
    // Predicated region
    $region10: #{tpu_custom_call.1} parent=1 // pred_check
      _
    $region11: #{tpu_custom_call.1} parent=1 // pred_check_branch
      %44 = sbr.rel (0) target = $region13
    $region12: #{tpu_custom_call.1} parent=1 // pred_region
      %s45 = sadd.s32 0, 0
      %s47 = ssub.s32 512, 512
      %48 = vsyncadd [#allocation11], %s47
      %s49 = smul.addr %s45, 128
      %s50 = scalar_lea.hbm %s2, %s49
      %s51 = sshll.u32 [#allocation12], 4
      %s52 = int_to_ptr.vmem [resolvable:$true] %s51
      %57 = dma.hbm_to_vmem [thread:$0]  %s50, 512, %s52, [#allocation11], 128, 128, 8
    $region13: #{tpu_custom_call.1} parent=1 // pred_fallthru
      _
    // Predicated region
    $region14: #{tpu_custom_call.1} parent=1 // pred_check
      _
    $region15: #{tpu_custom_call.1} parent=1 // pred_check_branch
      %59 = sbr.rel (0) target = $region17
    $region16: #{tpu_custom_call.1} parent=1 // pred_region
      %s60 = sadd.s32 0, 0
      %s62 = ssub.s32 512, 512
      %63 = vsyncadd [#allocation14], %s62
      %s64 = smul.addr %s60, 128
      %s65 = scalar_lea.hbm %s3, %s64
      %s66 = sshll.u32 [#allocation13], 4
      %s67 = int_to_ptr.vmem [resolvable:$true] %s66
      %72 = dma.hbm_to_vmem [thread:$0]  %s65, 512, %s67, [#allocation14], 128, 128, 8
    $region17: #{tpu_custom_call.1} parent=1 // pred_fallthru
      _
    // Predicated region
    $region18: #{tpu_custom_call.1} parent=1 // pred_check
      _
    $region19: #{tpu_custom_call.1} parent=1 // pred_check_branch
      %74 = sbr.rel (0) target = $region21
    $region20: #{tpu_custom_call.1} parent=1 // pred_region
      %s75 = sadd.s32 0, 0
      %s77 = ssub.s32 128, 128
      %78 = vsyncadd [#allocation14], %s77
      %s79 = smul.addr %s75, 128
      %s80 = scalar_lea.hbm %s4, %s79
      %s82 = sshll.u32 [#allocation15], 4
      %s83 = int_to_ptr.vmem [resolvable:$true] %s82
      %85 = dma.hbm_to_vmem [thread:$0]  %s80, 128, %s83, [#allocation14]
    $region21: #{tpu_custom_call.1} parent=1 // pred_fallthru
      _
    // Predicated region
    $region22: #{tpu_custom_call.1} parent=1 // pred_check
      _
    $region23: #{tpu_custom_call.1} parent=1 // pred_check_branch
      %87 = sbr.rel (0) target = $region25
    $region24: #{tpu_custom_call.1} parent=1 // pred_region
      %s88 = sadd.s32 0, 0
      %p89 = scmp.lt.s32.totalorder %s88, 0
      %s90 = scalar_select %p89, %s88, 0
      %s91 = smul.addr %s90, 8
      %s92 = scalar_lea.vmem %s5, %s91
      %s93 = sadd.s32 0, 0
    $region25: #{tpu_custom_call.1} parent=1 // pred_fallthru
      _
    // Predicated region
    $region26: #{tpu_custom_call.1} parent=1 // pred_check
      _
    $region27: #{tpu_custom_call.1} parent=1 // pred_check_branch
      %95 = sbr.rel (0) target = $region29
    $region28: #{tpu_custom_call.1} parent=1 // pred_region
      %96 = dma.done [#allocation8], 1024
    $region29: #{tpu_custom_call.1} parent=1 // pred_fallthru
      _
    // Predicated region
    $region30: #{tpu_custom_call.1} parent=1 // pred_check
      _
    $region31: #{tpu_custom_call.1} parent=1 // pred_check_branch
      %98 = sbr.rel (0) target = $region33
    $region32: #{tpu_custom_call.1} parent=1 // pred_region
      %99 = dma.done [#allocation11], 128
    $region33: #{tpu_custom_call.1} parent=1 // pred_fallthru
      _
    // Predicated region
    $region34: #{tpu_custom_call.1} parent=1 // pred_check
      _
    $region35: #{tpu_custom_call.1} parent=1 // pred_check_branch
      %101 = sbr.rel (0) target = $region37
    $region36: #{tpu_custom_call.1} parent=1 // pred_region
      %102 = dma.done [#allocation11], 512
    $region37: #{tpu_custom_call.1} parent=1 // pred_fallthru
      _
    // Predicated region
    $region38: #{tpu_custom_call.1} parent=1 // pred_check
      _
    $region39: #{tpu_custom_call.1} parent=1 // pred_check_branch
      %104 = sbr.rel (0) target = $region41
    $region40: #{tpu_custom_call.1} parent=1 // pred_region
      %105 = dma.done [#allocation14], 512
    $region41: #{tpu_custom_call.1} parent=1 // pred_fallthru
      _
    // Predicated region
    $region42: #{tpu_custom_call.1} parent=1 // pred_check
      _
    $region43: #{tpu_custom_call.1} parent=1 // pred_check_branch
      %107 = sbr.rel (0) target = $region45
    $region44: #{tpu_custom_call.1} parent=1 // pred_region
      %108 = dma.done [#allocation14], 128
    $region45: #{tpu_custom_call.1} parent=1 // pred_fallthru
      _
    %s109 = sadd.s32 0, 0
    %p110 = scmp.lt.s32.totalorder %s109, 0
    %s111 = scalar_select %p110, %s109, 0
    %s112 = smul.addr %s111, 8
    %s113 = scalar_lea.vmem %s5, %s112
    %s114 = sadd.s32 0, 0
    %s115 = sadd.s32 0, 0
    %s116 = sadd.s32 0, 0
    %s117 = sadd.s32 0, 0
    %s118 = sadd.s32 0, 0
    %s119 = sadd.s32 0, 0
    %p120 = scmp.lt.s32.totalorder %s119, 0
    %s121 = scalar_select %p120, %s119, 0
    %s122 = smul.addr %s121, 8
    %s123 = scalar_lea.vmem %s5, %s122
    %s124 = sadd.s32 0, 0
    %p125 = scmp.eq.s32.totalorder 0, 0
    // Predicated region
    $region46: #{tpu_custom_call.1} parent=1 // pred_check
      %p126 = pneg %p125
    $region47: #{tpu_custom_call.1} parent=1 // pred_check_branch
      %128 = sbr.rel (%p126) target = $region49
    $region48: #{tpu_custom_call.1} parent=1 // pred_region
      %129 = vst [vmem:[#allocation2] sm:$0xff] 0.0
      %130 = vst [vmem:[#allocation3] sm:$0xff] 0.0
      %131 = vst [vmem:[#allocation4] sm:$0xff] 0.0
      %132 = vst [vmem:[#allocation5] sm:$0xff] 0.0
      %133 = vst [vmem:[#allocation6] sm:$0xff] 0.0
    $region49: #{tpu_custom_call.1} parent=1 // pred_fallthru
      _
    %v134 = vld [vmem:[#allocation10] sm:$0xff]
    %v135 = vld [vmem:[%s123] sm:$0xff]
    %vm136 = vcmp.gt.f32.partialorder %v134, 0.0
    %v137 = vsel %vm136, 1, 0
    %v138 = vcvt.s32.f32 %v137
    %v139 = vlaneseq
    %v140 = vshrl.u32 %v139, 7
    %v141 = vlaneseq
    %v142 = vand.u32 %v141, 127
    %s143 = sadd.s32 0, 0
    %s144 = smul.u32 %s143, 8
    %v145 = vstv %s144
    %v146 = vadd.s32 %v145, %v140
    %v147 = vmul.u32 %v146, 128
    %v148 = vadd.s32 %v147, %v142
    %vm149 = vcmp.lt.s32.totalorder %v148, 672
    %v150 = vsel %vm149, 1, 0
    %v151 = vcvt.s32.f32 %v150
    %v152 = vld [vmem:[#allocation7] sm:$0xff]
    %v153 = vld [vmem:[#allocation7 + $0x8] sm:$0xff]
    %v154 = vld [vmem:[#allocation7 + $0x10] sm:$0xff]
    %v155 = vld [vmem:[#allocation7 + $0x18] sm:$0xff]
    %v156 = vld [vmem:[#allocation7 + $0x20] sm:$0xff]
    %v157 = vld [vmem:[#allocation7 + $0x28] sm:$0xff]
    %v158 = vld [vmem:[#allocation7 + $0x30] sm:$0xff]
    %v159 = vld [vmem:[#allocation7 + $0x38] sm:$0xff]
    %v160 = vcvt.f32.s32.to.zero.pseudo %v134
    %vm161 = vcmp.eq.s32.totalorder %v160, 1
    %vm162 = vcmp.eq.s32.totalorder %v160, 2
    %vm163 = vcmp.eq.s32.totalorder %v160, 3
    %vm164 = vcmp.eq.s32.totalorder %v160, 4
    %vm165 = vcmp.eq.s32.totalorder %v160, 5
    %vm166 = vcmp.eq.s32.totalorder %v160, 6
    %vm167 = vcmp.eq.s32.totalorder %v160, 7
    %vm168 = vcmp.eq.s32.totalorder %v160, 8
    %v169 = vxor.u32 %v152, 2147483648
    %v170 = vxor.u32 %v153, 2147483648
    %v171 = vxor.u32 %v154, 2147483648
    %v172 = vxor.u32 %v155, 2147483648
    %v173 = vxor.u32 %v156, 2147483648
    %v174 = vxor.u32 %v157, 2147483648
    %v175 = vxor.u32 %v158, 2147483648
    %v176 = vxor.u32 %v159, 2147483648
    %v177 = vmul.f32 %v169, 1.442695
    %v178 = vpow.pop %v177
    %v179 = vmul.f32 %v170, 1.442695
    %v180 = vpow.pop %v179
    %v181 = vmul.f32 %v171, 1.442695
    %v182 = vpow.pop %v181
    %v183 = vmul.f32 %v172, 1.442695
    %v184 = vpow.pop %v183
    %v185 = vmul.f32 %v173, 1.442695
    %v186 = vpow.pop %v185
    %v187 = vmul.f32 %v174, 1.442695
    %v188 = vpow.pop %v187
    %v189 = vmul.f32 %v175, 1.442695
    %v190 = vpow.pop %v189
    %v191 = vmul.f32 %v176, 1.442695
    %v192 = vpow.pop %v191
    %v193 = vadd.f32 %v178, 1.0
    %v194 = vadd.f32 %v180, 1.0
    %v195 = vadd.f32 %v182, 1.0
    %v196 = vadd.f32 %v184, 1.0
    %v197 = vadd.f32 %v186, 1.0
    %v198 = vadd.f32 %v188, 1.0
    %v199 = vadd.f32 %v190, 1.0
    %v200 = vadd.f32 %v192, 1.0
    %v201 = vrcp.pop %v193
    %v202 = vmul.f32 1.0, %v201
    %v203 = vrcp.pop %v194
    %v204 = vmul.f32 1.0, %v203
    %v205 = vrcp.pop %v195
    %v206 = vmul.f32 1.0, %v205
    %v207 = vrcp.pop %v196
    %v208 = vmul.f32 1.0, %v207
    %v209 = vrcp.pop %v197
    %v210 = vmul.f32 1.0, %v209
    %v211 = vrcp.pop %v198
    %v212 = vmul.f32 1.0, %v211
    %v213 = vrcp.pop %v199
    %v214 = vmul.f32 1.0, %v213
    %v215 = vrcp.pop %v200
    %v216 = vmul.f32 1.0, %v215
    %v217 = vsub.f32 1.0, %v202
    %v218 = vsub.f32 1.0, %v204
    %v219 = vsub.f32 1.0, %v206
    %v220 = vsub.f32 1.0, %v208
    %v221 = vsub.f32 1.0, %v210
    %v222 = vsub.f32 1.0, %v212
    %v223 = vsub.f32 1.0, %v214
    %v224 = vsub.f32 1.0, %v216
    %v225 = vsel %vm161, 0.25, 0.75
    %v226 = vsel %vm162, 0.25, 0.75
    %v227 = vsel %vm163, 0.25, 0.75
    %v228 = vsel %vm164, 0.25, 0.75
    %v229 = vsel %vm165, 0.25, 0.75
    %v230 = vsel %vm166, 0.25, 0.75
    %v231 = vsel %vm167, 0.25, 0.75
    %v232 = vsel %vm168, 0.25, 0.75
    %v233 = vsel %vm161, %v217, %v202
    %v234 = vsel %vm162, %v218, %v204
    %v235 = vsel %vm163, %v219, %v206
    %v236 = vsel %vm164, %v220, %v208
    %v237 = vsel %vm165, %v221, %v210
    %v238 = vsel %vm166, %v222, %v212
    %v239 = vsel %vm167, %v223, %v214
    %v240 = vsel %vm168, %v224, %v216
    %v241 = vsel %vm161, %v202, %v217
    %v242 = vsel %vm162, %v204, %v218
    %v243 = vsel %vm163, %v206, %v219
    %v244 = vsel %vm164, %v208, %v220
    %v245 = vsel %vm165, %v210, %v221
    %v246 = vsel %vm166, %v212, %v222
    %v247 = vsel %vm167, %v214, %v223
    %v248 = vsel %vm168, %v216, %v224
    %v249 = vmul.f32 %v233, %v233
    %v250 = vmul.f32 %v234, %v234
    %v251 = vmul.f32 %v235, %v235
    %v252 = vmul.f32 %v236, %v236
    %v253 = vmul.f32 %v237, %v237
    %v254 = vmul.f32 %v238, %v238
    %v255 = vmul.f32 %v239, %v239
    %v256 = vmul.f32 %v240, %v240
    %v257 = vmul.f32 %v225, %v249
    %v258 = vmul.f32 %v226, %v250
    %v259 = vmul.f32 %v227, %v251
    %v260 = vmul.f32 %v228, %v252
    %v261 = vmul.f32 %v229, %v253
    %v262 = vmul.f32 %v230, %v254
    %v263 = vmul.f32 %v231, %v255
    %v264 = vmul.f32 %v232, %v256
    %v265 = vadd.f32 %v241, 1e-09
    %v266 = vadd.f32 %v242, 1e-09
    %v267 = vadd.f32 %v243, 1e-09
    %v268 = vadd.f32 %v244, 1e-09
    %v269 = vadd.f32 %v245, 1e-09
    %v270 = vadd.f32 %v246, 1e-09
    %v271 = vadd.f32 %v247, 1e-09
    %v272 = vadd.f32 %v248, 1e-09
    %v273 = vlog2.pop %v265
    %v274 = vmul.f32 %v273, 0.6931472
    %v275 = vlog2.pop %v266
    %v276 = vmul.f32 %v275, 0.6931472
    %v277 = vlog2.pop %v267
    %v278 = vmul.f32 %v277, 0.6931472
    %v279 = vlog2.pop %v268
    %v280 = vmul.f32 %v279, 0.6931472
    %v281 = vlog2.pop %v269
    %v282 = vmul.f32 %v281, 0.6931472
    %v283 = vlog2.pop %v270
    %v284 = vmul.f32 %v283, 0.6931472
    %v285 = vlog2.pop %v271
    %v286 = vmul.f32 %v285, 0.6931472
    %v287 = vlog2.pop %v272
    %v288 = vmul.f32 %v287, 0.6931472
    %v289 = vsub.f32 0.0, %v274
    %v290 = vsub.f32 0.0, %v276
    %v291 = vsub.f32 0.0, %v278
    %v292 = vsub.f32 0.0, %v280
    %v293 = vsub.f32 0.0, %v282
    %v294 = vsub.f32 0.0, %v284
    %v295 = vsub.f32 0.0, %v286
    %v296 = vsub.f32 0.0, %v288
    %v297 = vmul.f32 %v257, %v289
    %v298 = vmul.f32 %v258, %v290
    %v299 = vmul.f32 %v259, %v291
    %v300 = vmul.f32 %v260, %v292
    %v301 = vmul.f32 %v261, %v293
    %v302 = vmul.f32 %v262, %v294
    %v303 = vmul.f32 %v263, %v295
    %v304 = vmul.f32 %v264, %v296
    %v305 = vld [vmem:[#allocation2] sm:$0xff]
    %v306 = vadd.f32 %v297, %v298
    %v307 = vadd.f32 %v306, %v299
    %v308 = vadd.f32 %v307, %v300
    %v309 = vadd.f32 %v308, %v301
    %v310 = vadd.f32 %v309, %v302
    %v311 = vadd.f32 %v310, %v303
    %v312 = vadd.f32 %v311, %v304
    %v313 = vmul.f32 %v312, %v151
    %v314 = vadd.f32 %v305, %v313
    %315 = vst [vmem:[#allocation2] sm:$0xff] %v314
    %v316 = vld [vmem:[#allocation12] sm:$0xff]
    %v317 = vld [vmem:[#allocation12 + $0x8] sm:$0xff]
    %v318 = vld [vmem:[#allocation12 + $0x10] sm:$0xff]
    %v319 = vld [vmem:[#allocation12 + $0x18] sm:$0xff]
    %v320 = vld [vmem:[#allocation13] sm:$0xff]
    %v321 = vld [vmem:[#allocation13 + $0x8] sm:$0xff]
    %v322 = vld [vmem:[#allocation13 + $0x10] sm:$0xff]
    %v323 = vld [vmem:[#allocation13 + $0x18] sm:$0xff]
    %v324 = vmul.f32 %v316, %v138
    %v325 = vmul.f32 %v317, %v138
    %v326 = vmul.f32 %v318, %v138
    %v327 = vmul.f32 %v319, %v138
    %v328 = vmul.f32 %v320, %v138
    %v329 = vmul.f32 %v321, %v138
    %v330 = vmul.f32 %v322, %v138
    %v331 = vmul.f32 %v323, %v138
    %v332 = vmin.f32 %v324, %v328
    %v333 = vmin.f32 %v326, %v330
    %v334 = vmin.f32 %v325, %v329
    %v335 = vmin.f32 %v327, %v331
    %v336 = vadd.f32 %v324, %v326
    %v337 = vadd.f32 %v325, %v327
    %v338 = vmul.f32 %v336, %v337
    %v339 = vadd.f32 %v328, %v330
    %v340 = vadd.f32 %v329, %v331
    %v341 = vmul.f32 %v339, %v340
    %v342 = vadd.f32 %v332, %v333
    %v343 = vadd.f32 %v334, %v335
    %v344 = vmul.f32 %v342, %v343
    %v345 = vadd.f32 %v344, 1.0
    %v346 = vadd.f32 %v338, %v341
    %v347 = vsub.f32 %v346, %v344
    %v348 = vadd.f32 %v347, 1.0
    %v349 = vrcp.pop %v348
    %v350 = vmul.f32 %v345, %v349
    %v351 = vmul.f32 %v350, %v138
    %vm352 = vcmp.gt.f32.partialorder %v151, 0.0
    %v353 = vsel %vm352, %v351, 1.0
    %v354 = vlog2.pop %v353
    %v355 = vmul.f32 %v354, 0.6931472
    %v356 = vsub.f32 0.0, %v355
    %v357 = vld [vmem:[#allocation3] sm:$0xff]
    %v358 = vmul.f32 %v356, %v135
    %v359 = vmul.f32 %v358, %v138
    %v360 = vadd.f32 %v357, %v359
    %361 = vst [vmem:[#allocation3] sm:$0xff] %v360
    %v362 = vld [vmem:[#allocation15] sm:$0xff]
    %v363 = vxor.u32 %v362, 2147483648
    %v364 = vmul.f32 %v363, 1.442695
    %v365 = vpow.pop %v364
    %v366 = vadd.f32 %v365, 1.0
    %v367 = vrcp.pop %v366
    %v368 = vmul.f32 1.0, %v367
    %v369 = vadd.f32 %v368, 1e-09
    %v370 = vlog2.pop %v369
    %v371 = vmul.f32 %v370, 0.6931472
    %v372 = vsub.f32 0.0, %v371
    %v373 = vmul.f32 %v135, %v372
    %v374 = vsub.f32 1.0, %v135
    %v375 = vsub.f32 1.0, %v368
    %v376 = vadd.f32 %v375, 1e-09
    %v377 = vlog2.pop %v376
    %v378 = vmul.f32 %v377, 0.6931472
    %v379 = vsub.f32 0.0, %v378
    %v380 = vmul.f32 %v374, %v379
    %v381 = vadd.f32 %v373, %v380
    %v382 = vld [vmem:[#allocation4] sm:$0xff]
    %v383 = vmul.f32 %v381, %v138
    %v384 = vadd.f32 %v382, %v383
    %385 = vst [vmem:[#allocation4] sm:$0xff] %v384
    %v386 = vld [vmem:[#allocation5] sm:$0xff]
    %v387 = vadd.f32 %v386, %v138
    %388 = vst [vmem:[#allocation5] sm:$0xff] %v387
    %v389 = vld [vmem:[#allocation6] sm:$0xff]
    %v390 = vmul.f32 %v135, %v138
    %v391 = vadd.f32 %v389, %v390
    %392 = vst [vmem:[#allocation6] sm:$0xff] %v391
    // Predicated region
    $region50: #{tpu_custom_call.1} parent=1 // pred_check
      %p393 = pneg %p125
    $region51: #{tpu_custom_call.1} parent=1 // pred_check_branch
      %395 = sbr.rel (%p393) target = $region53
    $region52: #{tpu_custom_call.1} parent=1 // pred_region
      %v396 = vld [vmem:[#allocation2] sm:$0xff]
      %397 = vadd.xlane.f32.xlu0 %v396
      %v398 = vpop.xlane.xlu0 %397
      %v399 = vrot.slane %v398, 4
      %v400 = vadd.f32 %v398, %v399
      %v401 = vrot.slane %v400, 2
      %v402 = vadd.f32 %v400, %v401
      %v403 = vrot.slane %v402, 1
      %v404 = vadd.f32 %v402, %v403
      %s405 = vtos %v404
      %v406 = vld [vmem:[#allocation3] sm:$0xff]
      %407 = vadd.xlane.f32.xlu0 %v406
      %v408 = vpop.xlane.xlu0 %407
      %v409 = vrot.slane %v408, 4
      %v410 = vadd.f32 %v408, %v409
      %v411 = vrot.slane %v410, 2
      %v412 = vadd.f32 %v410, %v411
      %v413 = vrot.slane %v412, 1
      %v414 = vadd.f32 %v412, %v413
      %s415 = vtos %v414
      %v416 = vld [vmem:[#allocation4] sm:$0xff]
      %417 = vadd.xlane.f32.xlu0 %v416
      %v418 = vpop.xlane.xlu0 %417
      %v419 = vrot.slane %v418, 4
      %v420 = vadd.f32 %v418, %v419
      %v421 = vrot.slane %v420, 2
      %v422 = vadd.f32 %v420, %v421
      %v423 = vrot.slane %v422, 1
      %v424 = vadd.f32 %v422, %v423
      %s425 = vtos %v424
      %v426 = vld [vmem:[#allocation5] sm:$0xff]
      %427 = vadd.xlane.f32.xlu0 %v426
      %v428 = vpop.xlane.xlu0 %427
      %v429 = vrot.slane %v428, 4
      %v430 = vadd.f32 %v428, %v429
      %v431 = vrot.slane %v430, 2
      %v432 = vadd.f32 %v430, %v431
      %v433 = vrot.slane %v432, 1
      %v434 = vadd.f32 %v432, %v433
      %s435 = vtos %v434
      %v436 = vld [vmem:[#allocation6] sm:$0xff]
      %437 = vadd.xlane.f32.xlu0 %v436
      %v438 = vpop.xlane.xlu0 %437
      %v439 = vrot.slane %v438, 4
      %v440 = vadd.f32 %v438, %v439
      %v441 = vrot.slane %v440, 2
      %v442 = vadd.f32 %v440, %v441
      %v443 = vrot.slane %v442, 1
      %v444 = vadd.f32 %v442, %v443
      %s445 = vtos %v444
      %vm446 = vcmp.eq.s32.totalorder %v142, 0
      %v447 = vstv %s405
      %v448 = vsel %vm446, %v447, 0.0
      %vm449 = vcmp.eq.s32.totalorder %v142, 1
      %v450 = vstv %s415
      %v451 = vsel %vm449, %v450, 0.0
      %v452 = vadd.f32 %v448, %v451
      %vm453 = vcmp.eq.s32.totalorder %v142, 2
      %v454 = vstv %s425
      %v455 = vsel %vm453, %v454, 0.0
      %v456 = vadd.f32 %v452, %v455
      %vm457 = vcmp.eq.s32.totalorder %v142, 3
      %v458 = vstv %s435
      %v459 = vsel %vm457, %v458, 0.0
      %v460 = vadd.f32 %v456, %v459
      %vm461 = vcmp.eq.s32.totalorder %v142, 4
      %v462 = vstv %s445
      %v463 = vsel %vm461, %v462, 0.0
      %v464 = vadd.f32 %v460, %v463
      %465 = vst [vmem:[#allocation16] sm:$0x1] %v464
    $region53: #{tpu_custom_call.1} parent=1 // pred_fallthru
      _
    // Predicated region
    $region54: #{tpu_custom_call.1} parent=1 // pred_check
      _
    $region55: #{tpu_custom_call.1} parent=1 // pred_check_branch
      %467 = sbr.rel (0) target = $region57
    $region56: #{tpu_custom_call.1} parent=1 // pred_region
      %s469 = ssub.s32 16, 16
      %470 = vsyncadd [#allocation9], %s469
      %s472 = sshll.u32 [#allocation16], 4
      %s473 = int_to_ptr.vmem [resolvable:$true] %s472
      %475 = dma.vmem_to_hbm [thread:$0]  %s473, 16, %s6, [#allocation9]
    $region57: #{tpu_custom_call.1} parent=1 // pred_fallthru
      _
    // Predicated region
    $region58: #{tpu_custom_call.1} parent=1 // pred_check
      _
    $region59: #{tpu_custom_call.1} parent=1 // pred_check_branch
      %477 = sbr.rel (0) target = $region61
    $region60: #{tpu_custom_call.1} parent=1 // pred_region
      %478 = dma.done [#allocation9], 16
    $region61: #{tpu_custom_call.1} parent=1 // pred_fallthru
      _
    %479 = vsyncpa [#allocation8], 1
    %480 = vsyncpa [#allocation11], 1
    %481 = vsyncpa [#allocation14], 1
    %482 = vsyncpa [#allocation9], 1

</llo_original>
